<compile_context>
chip_gen: v7x
topology: tpu7x:2x2x1
jax: 0.10.0
libtpu: 0.0.40
codegen_flags: <defaults>
</compile_context>

<pallas_src>
import functools

import jax
import jax.numpy as jnp
from jax.experimental import pallas as pl
from jax.experimental.pallas import tpu as pltpu

LEAKY_SLOPE = 0.01  # torch.nn.LeakyReLU default negative_slope


def _round_up(x, m):
    return ((x + m - 1) // m) * m


def _deep_dense_kernel(*refs, n_embed, n_vals_total, n_cont, n_layers,
                       compute_dtype, act_dtype):
    """refs = ([x_cat], [x_cont], w_0..w_{L-1}, b_0..b_{L-1}, o_ref).

    Layer 0 is one matmul: a fused one-hot LHS (categorical indices already
    offset into the concatenated vocabulary) concatenated with the continuous
    columns, multiplied against the pre-folded layer-0 weight.
    """
    r = 0
    x_cat_ref = None
    if n_embed:
        x_cat_ref = refs[r]
        r += 1
    x_cont_ref = None
    if n_cont:
        x_cont_ref = refs[r]
        r += 1
    w_refs = refs[r:r + n_layers]
    b_refs = refs[r + n_layers:r + 2 * n_layers]
    o_ref = refs[r + 2 * n_layers]

    # ---- build fused layer-0 LHS: [onehot | x_cont] ----
    if n_embed:
        cat = x_cat_ref[...]                             # (TB, E) int32, pre-offset
        tb = cat.shape[0]
        iota = jax.lax.broadcasted_iota(jnp.int32, (tb, n_vals_total), 1)
        hit = cat[:, 0:1] == iota                        # each column hits a
        for t in range(1, n_embed):                      # disjoint lane range
            hit = jnp.logical_or(hit, cat[:, t:t + 1] == iota)
        lhs = hit.astype(compute_dtype)                  # (TB, sum n_vals)
        if n_cont:
            lhs = jnp.concatenate(
                [lhs, x_cont_ref[...].astype(compute_dtype)], axis=1)
    else:
        lhs = x_cont_ref[...].astype(compute_dtype)

    # ---- dense stack (statically unrolled); f32 MXU accumulation ----
    x = lhs
    h = None
    for li in range(n_layers):
        acc = jnp.dot(x, w_refs[li][...], preferred_element_type=jnp.float32)
        h = acc.astype(act_dtype) + b_refs[li][...]      # bias add in act_dtype
        h = jnp.maximum(h, LEAKY_SLOPE * h)              # LeakyReLU: 2 VALU ops
        if li + 1 < n_layers:
            x = h.astype(compute_dtype)

    o_ref[...] = h.astype(o_ref.dtype)


def deep_dense_forward(X, embed_tables, embed_col_idx, cont_col_idx,
                       weights, biases, *, compute_dtype=jnp.bfloat16,
                       act_dtype=None, batch_tile=None, lane_dense_output=True):
    """Mirrors DeepDense.forward, fully inside one batch-tiled Pallas kernel."""
    B = int(X.shape[0])
    n_embed = len(embed_tables)
    n_cont = len(cont_col_idx)
    n_layers = len(weights)
    out_dim = int(weights[-1].shape[1])
    ALIGN = 16  # batch-tile alignment (bf16-friendly sublane multiple)

    # Elementwise-tail dtype: bf16 where the VPU is bf16-native (v6e/v7x).
    if act_dtype is None:
        act_dtype = jnp.float32
        if compute_dtype == jnp.bfloat16:
            try:
                kind = jax.devices()[0].device_kind.lower()
                if ("v6" in kind) or ("v7" in kind):
                    act_dtype = jnp.bfloat16
            except Exception:
                pass
    out_dtype = jnp.bfloat16 if compute_dtype == jnp.bfloat16 else jnp.float32

    # ---- fold embedding tables into layer-0's weight ONCE (wrapper side) ----
    n_vals = [int(t.shape[0]) for t in embed_tables]
    n_vals_total = sum(n_vals)
    voffs, acc_off = [], 0
    for v in n_vals:
        voffs.append(acc_off)
        acc_off += v
    w0 = weights[0].astype(jnp.float32)
    blocks, off = [], 0
    for t in embed_tables:
        d = int(t.shape[1])
        blocks.append(jnp.dot(t.astype(jnp.float32), w0[off:off + d, :],
                              precision="highest"))        # (n_vals, h0)
        off += d
    if n_cont:
        blocks.append(w0[off:off + n_cont, :])              # cont rows pass through
    w0_folded = blocks[0] if len(blocks) == 1 else jnp.concatenate(blocks, axis=0)

    # Parameters: compute_dtype weights, act_dtype biases, padded last layer
    # to a 128-lane multiple for unmasked, lane-dense stores.
    out_lanes = _round_up(out_dim, 128) if lane_dense_output else out_dim
    w_list = ([w0_folded.astype(compute_dtype)]
              + [w.astype(compute_dtype) for w in weights[1:]])
    b_list = [b.reshape(1, -1).astype(act_dtype) for b in biases]
    if out_lanes != out_dim:
        w_list[-1] = jnp.pad(w_list[-1], ((0, 0), (0, out_lanes - out_dim)))
        b_list[-1] = jnp.pad(b_list[-1], ((0, 0), (0, out_lanes - out_dim)))

    # Packed inputs: categorical indices pre-offset into the concatenated
    # vocabulary (exact as long as the float-encoded indices are < 2^24),
    # continuous columns in compute_dtype.
    if n_embed:
        cat_cols = jnp.asarray(embed_col_idx, dtype=jnp.int32)
        x_cat = (X[:, cat_cols].astype(jnp.int32)
                 + jnp.asarray(voffs, dtype=jnp.int32)[None, :])
    if n_cont:
        cont_cols = jnp.asarray(cont_col_idx, dtype=jnp.int32)
        x_cont = X[:, cont_cols].astype(compute_dtype)

    # ---- generation-aware VMEM budget and batch-tile selection ----
    try:
        vmem_cap = int(pltpu.get_tpu_info().vmem_capacity_bytes)
    except Exception:
        vmem_cap = 128 * 2 ** 20
    if vmem_cap <= 64 * 2 ** 20:          # v7x-class: 64 MiB per TensorCore
        budget, vmem_req_cap, default_tile = 36 << 20, 48 << 20, 1024
    else:                                 # v5e / v6e: 128 MiB
        budget, vmem_req_cap, default_tile = 80 << 20, 96 << 20, 2048
    if batch_tile is None:
        batch_tile = default_tile

    resident = sum(int(a.size) * a.dtype.itemsize for a in (*w_list, *b_list))
    max_width = max([int(w.shape[1]) for w in w_list] + [int(w_list[0].shape[0])])
    out_isz = jnp.dtype(out_dtype).itemsize
    row_in_bytes = n_embed * 4 + n_cont * jnp.dtype(compute_dtype).itemsize

    def footprint(tb):
        streamed = 2 * tb * (row_in_bytes + out_lanes * out_isz)  # dbl-buffered tiles
        live = 4 * tb * max_width * 4                             # f32 activation slop
        return streamed + 2 * resident + live                     # params counted 2x (conservative)

    tile = max(ALIGN, ALIGN * (min(batch_tile, _round_up(B, ALIGN)) // ALIGN))
    while tile > ALIGN and footprint(tile) > budget:
        tile = max(ALIGN, ALIGN * ((tile // 2) // ALIGN))
    # Keep >= 2 grid steps so v7x's second TensorCore gets work (no-op cost
    # on single-TC v5e/v6e: ~0.35 us extra per step).
    if _round_up(B, tile) // tile < 2 and B >= 2 * ALIGN:
        tile = max(ALIGN, _round_up(-(-B // 2), ALIGN))
    b_pad = _round_up(B, tile)

    pads = b_pad - B
    if pads:
        # Padded rows: shifted index 0 hits a valid lane; sliced off below.
        if n_embed:
            x_cat = jnp.pad(x_cat, ((0, pads), (0, 0)))
        if n_cont:
            x_cont = jnp.pad(x_cont, ((0, pads), (0, 0)))

    grid = (b_pad // tile,)
    args, in_specs = [], []
    if n_embed:
        args.append(x_cat)
        in_specs.append(pl.BlockSpec((tile, n_embed), lambda i: (i, 0)))
    if n_cont:
        args.append(x_cont)
        in_specs.append(pl.BlockSpec((tile, n_cont), lambda i: (i, 0)))
    for a in (*w_list, *b_list):
        args.append(a)
        # Constant index_map -> resident in VMEM across the whole grid.
        in_specs.append(pl.BlockSpec(a.shape, lambda i: (0, 0)))
    out_spec = pl.BlockSpec((tile, out_lanes), lambda i: (i, 0))

    flops = 2 * b_pad * sum(int(w.shape[0]) * int(w.shape[1]) for w in w_list)
    bytes_accessed = (b_pad * row_in_bytes + b_pad * out_lanes * out_isz
                      + resident)

    kernel = functools.partial(
        _deep_dense_kernel, n_embed=n_embed, n_vals_total=n_vals_total,
        n_cont=n_cont, n_layers=n_layers, compute_dtype=compute_dtype,
        act_dtype=act_dtype)

    out = pl.pallas_call(
        kernel,
        out_shape=jax.ShapeDtypeStruct((b_pad, out_lanes), out_dtype),
        grid=grid,
        in_specs=in_specs,
        out_specs=out_spec,
        compiler_params=pltpu.CompilerParams(
            dimension_semantics=("parallel",),   # megacore sharding on v7x
            vmem_limit_bytes=int(min(vmem_req_cap,
                                     max(32 << 20,
                                         footprint(tile) + (8 << 20)))),
        ),
        cost_estimate=pl.CostEstimate(flops=int(flops), transcendentals=0,
                                      bytes_accessed=int(bytes_accessed)),
    )(*args)

    return out[:B, :out_dim]


def _reference_forward(X, embed_tables, embed_col_idx, cont_col_idx,
                       weights, biases):
    """Pure-JAX f32 reference matching the PyTorch module semantics."""
    parts = []
    for tbl, col in zip(embed_tables, embed_col_idx):
        parts.append(jnp.take(tbl, X[:, col].astype(jnp.int32), axis=0))
    if cont_col_idx:
        parts.append(X[:, jnp.array(cont_col_idx)].astype(jnp.float32))
    h = jnp.concatenate(parts, axis=1)
    for w, b in zip(weights, biases):
        h = h @ w + b
        h = jnp.where(h > 0, h, LEAKY_SLOPE * h)
    return h


if __name__ == "__main__":
    key = jax.random.PRNGKey(0)

    # Model config (mirrors the docstring example, slightly larger dims):
    # 4 categorical columns (4 unique values each, embedding dim 8),
    # 1 continuous column; hidden_layers = [32, 16].
    colnames = ["a", "b", "c", "d", "e"]
    embed_input = [(c, 4, 8) for c in colnames[:4]]
    continuous_cols = ["e"]
    deep_column_idx = {k: v for v, k in enumerate(colnames)}
    hidden_layers = [32, 16]

    emb_inp_dim = sum(e[2] for e in embed_input)          # 32
    cont_inp_dim = len(continuous_cols)                   # 1
    input_dim = emb_inp_dim + cont_inp_dim                # 33
    layer_dims = [input_dim] + hidden_layers              # [33, 32, 16]

    keys = jax.random.split(key, 16)
    embed_tables = []
    for i, (_, n_vals, dim) in enumerate(embed_input):
        embed_tables.append(
            jax.random.normal(keys[i], (n_vals, dim), dtype=jnp.float32) * 0.1)
    weights, biases = [], []
    for i in range(1, len(layer_dims)):
        fan_in, fan_out = layer_dims[i - 1], layer_dims[i]
        bound = 1.0 / float(fan_in) ** 0.5
        weights.append(jax.random.uniform(keys[4 + 2 * i], (fan_in, fan_out),
                                          minval=-bound, maxval=bound,
                                          dtype=jnp.float32))
        biases.append(jax.random.uniform(keys[5 + 2 * i], (fan_out,),
                                         minval=-bound, maxval=bound,
                                         dtype=jnp.float32))

    embed_col_idx = [deep_column_idx[c] for c, _, _ in embed_input]
    cont_col_idx = [deep_column_idx[c] for c in continuous_cols]

    def make_X(k, batch):
        k_cat, k_cont = jax.random.split(k)
        X_cat = jax.random.randint(k_cat, (batch, 4), 0, 4).astype(jnp.float32)
        X_cont = jax.random.uniform(k_cont, (batch, 1), dtype=jnp.float32)
        return jnp.concatenate([X_cat, X_cont], axis=1)

    # --- small batch (docstring-style example) ---
    batch = 8
    X = make_X(keys[-1], batch)                           # (8, 5)
    ref = _reference_forward(X, embed_tables, embed_col_idx, cont_col_idx,
                             weights, biases)

    # f32 compute path: near bit-accurate vs reference.
    out_f32 = deep_dense_forward(X, embed_tables, embed_col_idx, cont_col_idx,
                                 weights, biases, compute_dtype=jnp.float32)
    out_f32 = jax.block_until_ready(out_f32)
    assert out_f32.shape == (batch, hidden_layers[-1])
    assert jnp.allclose(out_f32, ref, atol=1e-4, rtol=1e-4)

    # bf16 MXU path (default): relaxed tolerance vs the f32 reference.
    out_bf16 = deep_dense_forward(X, embed_tables, embed_col_idx, cont_col_idx,
                                  weights, biases)
    out_bf16 = jax.block_until_ready(out_bf16)
    assert out_bf16.shape == (batch, hidden_layers[-1])
    assert jnp.allclose(out_bf16, ref, atol=5e-2, rtol=5e-2)

    # --- larger batch: exercises multi-tile grid + batch padding path ---
    batch2 = 200
    X2 = make_X(keys[-2], batch2)                         # (200, 5)
    ref2 = _reference_forward(X2, embed_tables, embed_col_idx, cont_col_idx,
                              weights, biases)
    out2 = deep_dense_forward(X2, embed_tables, embed_col_idx, cont_col_idx,
                              weights, biases, compute_dtype=jnp.float32,
                              batch_tile=64)
    out2 = jax.block_until_ready(out2)
    assert out2.shape == (batch2, hidden_layers[-1])
    assert jnp.allclose(out2, ref2, atol=1e-4, rtol=1e-4)

    print("KERNEL_OK")
</pallas_src>

<mosaic_0001>
module attributes {stable_mosaic.version = 11 : i64} {
  func.func @_deep_dense_kernel(%arg0: i32, %arg1: memref<16x4xi32, #tpu.memory_space<vmem>>, %arg2: memref<16x1xf32, #tpu.memory_space<vmem>>, %arg3: memref<17x32xf32, #tpu.memory_space<vmem>>, %arg4: memref<32x128xf32, #tpu.memory_space<vmem>>, %arg5: memref<1x32xf32, #tpu.memory_space<vmem>>, %arg6: memref<1x128xf32, #tpu.memory_space<vmem>>, %arg7: memref<16x128xf32, #tpu.memory_space<vmem>>) attributes {dimension_semantics = [#tpu.dimension_semantics<parallel>], iteration_bounds = array<i64: 1>, scalar_prefetch = 0 : i64, scratch_operands = 0 : i64, tpu.core_type = #tpu.core_type<tc>, window_params = [{transform_indices = @transform_0, window_bounds = array<i64: 16, 4>}, {transform_indices = @transform_1, window_bounds = array<i64: 16, 1>}, {pipeline_mode = #tpu.pipeline_mode<synchronous>, transform_indices = @transform_2, window_bounds = array<i64: 17, 32>}, {pipeline_mode = #tpu.pipeline_mode<synchronous>, transform_indices = @transform_3, window_bounds = array<i64: 32, 128>}, {pipeline_mode = #tpu.pipeline_mode<synchronous>, transform_indices = @transform_4, window_bounds = array<i64: 1, 32>}, {pipeline_mode = #tpu.pipeline_mode<synchronous>, transform_indices = @transform_5, window_bounds = array<i64: 1, 128>}, {transform_indices = @transform_6, window_bounds = array<i64: 16, 128>}]} {
    %c0 = arith.constant 0 : index
    %c0_0 = arith.constant 0 : index
    %0 = vector.load %arg1[%c0, %c0_0] : memref<16x4xi32, #tpu.memory_space<vmem>>, vector<16x4xi32>
    %1 = tpu.iota {dimensions = array<i32: 1>} : vector<16x16xi32>
    %2 = vector.extract_strided_slice %0 {offsets = [0, 0], sizes = [16, 1], strides = [1, 1]} : vector<16x4xi32> to vector<16x1xi32>
    %3 = vector.broadcast %2 : vector<16x1xi32> to vector<16x16xi32>
    %4 = arith.cmpi eq, %3, %1 : vector<16x16xi32>
    %5 = vector.extract_strided_slice %0 {offsets = [0, 1], sizes = [16, 1], strides = [1, 1]} : vector<16x4xi32> to vector<16x1xi32>
    %6 = vector.broadcast %5 : vector<16x1xi32> to vector<16x16xi32>
    %7 = arith.cmpi eq, %6, %1 : vector<16x16xi32>
    %8 = arith.ori %4, %7 : vector<16x16xi1>
    %9 = vector.extract_strided_slice %0 {offsets = [0, 2], sizes = [16, 1], strides = [1, 1]} : vector<16x4xi32> to vector<16x1xi32>
    %10 = vector.broadcast %9 : vector<16x1xi32> to vector<16x16xi32>
    %11 = arith.cmpi eq, %10, %1 : vector<16x16xi32>
    %12 = arith.ori %8, %11 : vector<16x16xi1>
    %13 = vector.extract_strided_slice %0 {offsets = [0, 3], sizes = [16, 1], strides = [1, 1]} : vector<16x4xi32> to vector<16x1xi32>
    %14 = vector.broadcast %13 : vector<16x1xi32> to vector<16x16xi32>
    %15 = arith.cmpi eq, %14, %1 : vector<16x16xi32>
    %16 = arith.ori %12, %15 : vector<16x16xi1>
    %17 = arith.extui %16 : vector<16x16xi1> to vector<16x16xi32>
    %18 = arith.sitofp %17 : vector<16x16xi32> to vector<16x16xf32>
    %c0_1 = arith.constant 0 : index
    %c0_2 = arith.constant 0 : index
    %19 = vector.load %arg2[%c0_1, %c0_2] : memref<16x1xf32, #tpu.memory_space<vmem>>, vector<16x1xf32>
    %20 = tpu.concatenate %18, %19 in 1 : vector<16x16xf32>, vector<16x1xf32> -> vector<16x17xf32>
    %c0_3 = arith.constant 0 : index
    %c0_4 = arith.constant 0 : index
    %21 = vector.load %arg3[%c0_3, %c0_4] : memref<17x32xf32, #tpu.memory_space<vmem>>, vector<17x32xf32>
    %cst = arith.constant dense<0.000000e+00> : vector<16x32xf32>
    %22 = tpu.matmul %20, %21, %cst {dimension_numbers = #tpu.dot_dimension_numbers<[1], [0], [0], [1], [0, 0, 1, 1], [], []>} : vector<16x17xf32>, vector<17x32xf32>, vector<16x32xf32> -> vector<16x32xf32>
    %c0_5 = arith.constant 0 : index
    %c0_6 = arith.constant 0 : index
    %23 = vector.load %arg5[%c0_5, %c0_6] : memref<1x32xf32, #tpu.memory_space<vmem>>, vector<1x32xf32>
    %24 = vector.broadcast %23 : vector<1x32xf32> to vector<16x32xf32>
    %25 = arith.addf %22, %24 : vector<16x32xf32>
    %cst_7 = arith.constant 0.00999999977 : f32
    %26 = vector.broadcast %cst_7 : f32 to vector<16x32xf32>
    %27 = arith.mulf %26, %25 : vector<16x32xf32>
    %28 = arith.maximumf %25, %27 : vector<16x32xf32>
    %c0_8 = arith.constant 0 : index
    %c0_9 = arith.constant 0 : index
    %29 = vector.load %arg4[%c0_8, %c0_9] : memref<32x128xf32, #tpu.memory_space<vmem>>, vector<32x128xf32>
    %cst_10 = arith.constant dense<0.000000e+00> : vector<16x128xf32>
    %30 = tpu.matmul %28, %29, %cst_10 {dimension_numbers = #tpu.dot_dimension_numbers<[1], [0], [0], [1], [0, 0, 1, 1], [], []>} : vector<16x32xf32>, vector<32x128xf32>, vector<16x128xf32> -> vector<16x128xf32>
    %c0_11 = arith.constant 0 : index
    %c0_12 = arith.constant 0 : index
    %31 = vector.load %arg6[%c0_11, %c0_12] : memref<1x128xf32, #tpu.memory_space<vmem>>, vector<1x128xf32>
    %32 = vector.broadcast %31 : vector<1x128xf32> to vector<16x128xf32>
    %33 = arith.addf %30, %32 : vector<16x128xf32>
    %cst_13 = arith.constant 0.00999999977 : f32
    %34 = vector.broadcast %cst_13 : f32 to vector<16x128xf32>
    %35 = arith.mulf %34, %33 : vector<16x128xf32>
    %36 = arith.maximumf %33, %35 : vector<16x128xf32>
    %c0_14 = arith.constant 0 : index
    %c0_15 = arith.constant 0 : index
    %37 = vector.load %arg7[%c0_14, %c0_15] : memref<16x128xf32, #tpu.memory_space<vmem>>, vector<16x128xf32>
    tpu.vector_store %arg7[%c0_14, %c0_15], %36 {strides = array<i32>} : memref<16x128xf32, #tpu.memory_space<vmem>>, vector<16x128xf32>,
    return
  }
  func.func @transform_0(%arg0: i32) -> (i32, i32) {
    %c0_i32 = arith.constant 0 : i32
    %c0_i32_0 = arith.constant 0 : i32
    return %arg0, %c0_i32 : i32, i32
  }
  func.func @transform_1(%arg0: i32) -> (i32, i32) {
    %c0_i32 = arith.constant 0 : i32
    %c0_i32_0 = arith.constant 0 : i32
    return %arg0, %c0_i32 : i32, i32
  }
  func.func @transform_2(%arg0: i32) -> (i32, i32) {
    %c0_i32 = arith.constant 0 : i32
    %c0_i32_0 = arith.constant 0 : i32
    %c0_i32_1 = arith.constant 0 : i32
    return %c0_i32, %c0_i32_0 : i32, i32
  }
  func.func @transform_3(%arg0: i32) -> (i32, i32) {
    %c0_i32 = arith.constant 0 : i32
    %c0_i32_0 = arith.constant 0 : i32
    %c0_i32_1 = arith.constant 0 : i32
    return %c0_i32, %c0_i32_0 : i32, i32
  }
  func.func @transform_4(%arg0: i32) -> (i32, i32) {
    %c0_i32 = arith.constant 0 : i32
    %c0_i32_0 = arith.constant 0 : i32
    %c0_i32_1 = arith.constant 0 : i32
    return %c0_i32, %c0_i32_0 : i32, i32
  }
  func.func @transform_5(%arg0: i32) -> (i32, i32) {
    %c0_i32 = arith.constant 0 : i32
    %c0_i32_0 = arith.constant 0 : i32
    %c0_i32_1 = arith.constant 0 : i32
    return %c0_i32, %c0_i32_0 : i32, i32
  }
  func.func @transform_6(%arg0: i32) -> (i32, i32) {
    %c0_i32 = arith.constant 0 : i32
    %c0_i32_0 = arith.constant 0 : i32
    return %arg0, %c0_i32 : i32, i32
  }
}

</mosaic_0001>

<llo_original>
// kernel: tpu_custom_call.1
$region0: #{tpu_custom_call.1}
  #allocation0 [shape = 'u32[]', space=smem, size = 0x4, offset = 0x4, fixed_abs, tag = 'smem constant byte address 0x4 - core index']
  #allocation1 [shape = 'u32[144,128]{1,0:T(1,128)}', space=vmem, size = 0x12000, scoped, tag = 'internal scratch']
  %s0 = inlined_call_operand.vmem [shape: s32[16,4], index: 0, kind: input, shape index: {}]
  %s1 = inlined_call_operand.vmem [shape: f32[16,1], index: 1, kind: input, shape index: {}]
  %s2 = inlined_call_operand.hbm [shape: f32[17,32], index: 2, kind: input, shape index: {}]
  %s3 = inlined_call_operand.vmem [shape: f32[32,128], index: 3, kind: input, shape index: {}]
  %s4 = inlined_call_operand.vmem [shape: f32[1,32], index: 4, kind: input, shape index: {}]
  %s5 = inlined_call_operand.vmem [shape: f32[1,128], index: 5, kind: input, shape index: {}]
  %s6 = inlined_call_operand.hbm [shape: f32[16,128], index: 6, kind: output, shape index: {}]
  %s7 = sld [smem:[#allocation0]]
  $region38: #{tpu_custom_call.1} parent=0
    _
  %s9 = ssub.s32 1, %s7
  %s10 = scalar_select 0, %s9, %s7
  $region1: #{tpu_custom_call.1} parent=0
    #allocation2 [shape = 'u8[12288]{0}', space=vmem, size = 0x3000, scoped, tag = 'input window, operand 2, single buffered']
    #allocation3 [shape = 's32[1]{0}', space=sflag, size = 0x4, scoped, tag = 'scoped memory for tpu_custom_call.1']
    #allocation4 [shape = 's32[1]{0}', space=sflag, size = 0x4, scoped, tag = 'scoped memory for tpu_custom_call.1']
    #allocation5 [shape = 'u8[8192]{0}', space=vmem, size = 0x2000, scoped, tag = 'output window, operand 0, single buffered']
    %11 = vsyncpa [#allocation3], 0
    %12 = vsyncpa [#allocation4], 0
    // Predicated region
    $region2: #{tpu_custom_call.1} parent=1 // pred_check
      _
    $region3: #{tpu_custom_call.1} parent=1 // pred_check_branch
      %14 = sbr.rel (0) target = $region5
    $region4: #{tpu_custom_call.1} parent=1 // pred_region
      _
    $region5: #{tpu_custom_call.1} parent=1 // pred_fallthru
      _
    // Predicated region
    $region6: #{tpu_custom_call.1} parent=1 // pred_check
      _
    $region7: #{tpu_custom_call.1} parent=1 // pred_check_branch
      %16 = sbr.rel (0) target = $region9
    $region8: #{tpu_custom_call.1} parent=1 // pred_region
      _
    $region9: #{tpu_custom_call.1} parent=1 // pred_fallthru
      _
    // Predicated region
    $region10: #{tpu_custom_call.1} parent=1 // pred_check
      _
    $region11: #{tpu_custom_call.1} parent=1 // pred_check_branch
      %18 = sbr.rel (0) target = $region13
    $region12: #{tpu_custom_call.1} parent=1 // pred_region
      %s20 = ssub.s32 384, 384
      %21 = vsyncadd [#allocation3], %s20
      %s22 = sshll.u32 [#allocation2], 4
      %s23 = int_to_ptr.vmem [resolvable:$true] %s22
      %28 = dma.hbm_to_vmem [thread:$0]  %s2, 384, %s23, [#allocation3], 128, 128, 8
    $region13: #{tpu_custom_call.1} parent=1 // pred_fallthru
      _
    // Predicated region
    $region14: #{tpu_custom_call.1} parent=1 // pred_check
      _
    $region15: #{tpu_custom_call.1} parent=1 // pred_check_branch
      %30 = sbr.rel (0) target = $region17
    $region16: #{tpu_custom_call.1} parent=1 // pred_region
      _
    $region17: #{tpu_custom_call.1} parent=1 // pred_fallthru
      _
    // Predicated region
    $region18: #{tpu_custom_call.1} parent=1 // pred_check
      _
    $region19: #{tpu_custom_call.1} parent=1 // pred_check_branch
      %32 = sbr.rel (0) target = $region21
    $region20: #{tpu_custom_call.1} parent=1 // pred_region
      _
    $region21: #{tpu_custom_call.1} parent=1 // pred_fallthru
      _
    // Predicated region
    $region22: #{tpu_custom_call.1} parent=1 // pred_check
      _
    $region23: #{tpu_custom_call.1} parent=1 // pred_check_branch
      %34 = sbr.rel (0) target = $region25
    $region24: #{tpu_custom_call.1} parent=1 // pred_region
      _
    $region25: #{tpu_custom_call.1} parent=1 // pred_fallthru
      _
    // Predicated region
    $region26: #{tpu_custom_call.1} parent=1 // pred_check
      _
    $region27: #{tpu_custom_call.1} parent=1 // pred_check_branch
      %36 = sbr.rel (0) target = $region29
    $region28: #{tpu_custom_call.1} parent=1 // pred_region
      %37 = dma.done [#allocation3], 384
    $region29: #{tpu_custom_call.1} parent=1 // pred_fallthru
      _
    %v38 = vld [vmem:[%s0] sm:$0xff]
    %v39 = vld [vmem:[%s0 + $0x8] sm:$0xff]
    %v40 = vlaneseq
    %v41 = vand.u32 %v40, 127
    %42 = vset.pattern.permute.xlu0 0
    %43 = vperm.xlu0 %42, %v38
    %v44 = vpop.permute.xlu0 %43
    %45 = vset.pattern.permute.xlu0 0
    %46 = vperm.xlu0 %45, %v39
    %v47 = vpop.permute.xlu0 %46
    %vm48 = vcmp.eq.s32.totalorder %v44, %v41
    %vm49 = vcmp.eq.s32.totalorder %v47, %v41
    %50 = vset.pattern.permute.xlu0 1
    %51 = vperm.xlu0 %50, %v38
    %v52 = vpop.permute.xlu0 %51
    %53 = vset.pattern.permute.xlu0 1
    %54 = vperm.xlu0 %53, %v39
    %v55 = vpop.permute.xlu0 %54
    %vm56 = vcmp.eq.s32.totalorder %v52, %v41
    %vm57 = vcmp.eq.s32.totalorder %v55, %v41
    %vm58 = vmor %vm48, %vm56
    %vm59 = vmor %vm49, %vm57
    %60 = vset.pattern.permute.xlu0 2
    %61 = vperm.xlu0 %60, %v38
    %v62 = vpop.permute.xlu0 %61
    %63 = vset.pattern.permute.xlu0 2
    %64 = vperm.xlu0 %63, %v39
    %v65 = vpop.permute.xlu0 %64
    %vm66 = vcmp.eq.s32.totalorder %v62, %v41
    %vm67 = vcmp.eq.s32.totalorder %v65, %v41
    %vm68 = vmor %vm58, %vm66
    %vm69 = vmor %vm59, %vm67
    %70 = vset.pattern.permute.xlu0 3
    %71 = vperm.xlu0 %70, %v38
    %v72 = vpop.permute.xlu0 %71
    %73 = vset.pattern.permute.xlu0 3
    %74 = vperm.xlu0 %73, %v39
    %v75 = vpop.permute.xlu0 %74
    %vm76 = vcmp.eq.s32.totalorder %v72, %v41
    %vm77 = vcmp.eq.s32.totalorder %v75, %v41
    %vm78 = vmor %vm68, %vm76
    %vm79 = vmor %vm69, %vm77
    %v80 = vsel %vm78, 1, 0
    %v81 = vsel %vm79, 1, 0
    %v82 = vcvt.s32.f32 %v80
    %v83 = vcvt.s32.f32 %v81
    %v84 = vld [vmem:[%s1] sm:$0xff]
    %v85 = vld [vmem:[%s1 + $0x8] sm:$0xff]
    %88 = vrot.lane.b32.xlu0 %v84, 16
    %v89 = vpop.permute.xlu0 %88
    %90 = vrot.lane.b32.xlu0 %v85, 16
    %v91 = vpop.permute.xlu0 %90
    %vm94 = vcmask 130048
    %v95 = vsel %vm94, %v82, %v89
    %v96 = vsel %vm94, %v83, %v91
    %v97 = vld [vmem:[#allocation2] sm:$0xff]
    %v98 = vld [vmem:[#allocation2 + $0x8] sm:$0xff]
    %v99 = vld [vmem:[#allocation2 + $0x10] sm:$0x1]
    %v100 = vld [vmem:[%s4] sm:$0x1]
    %v102 = vlaneseq
    %v103 = vshrl.u32 %v102, 7
    %v104 = vsub.s32 0, %v103
    %v105 = vrot.slane %v100, %v104
    %vm107 = vcmask 138240
    %v109 = vsel %vm107, %v95, 0
    %v112 = vsel %vm107, %v96, 0
    %vm114 = vcmask 1040384
    %v116 = vsel %vm114, %v99, 0
    %118 = vmatprep.subr.mxu0 0.0
    %119 = vmatpush1.msra.mxu0 %v97
    %120 = vmatprep.subr.mxu0 0.0
    %121 = vmatpush1.msra.mxu0 %v98
    %122 = vmatprep.subr.mxu0 0.0
    %123 = vmatpush1.msra.mxu0 %v116
    %124 = vmatprep.subr.mxu0 0.0
    %125 = vmatpush1.msra.mxu0 0.0
    %126 = vmatprep.subr.mxu0 0.0
    %127 = vmatpush1.msra.mxu0 0.0
    %128 = vmatprep.subr.mxu0 0.0
    %129 = vmatpush1.msra.mxu0 0.0
    %130 = vmatprep.subr.mxu0 0.0
    %131 = vmatpush1.msra.mxu0 0.0
    %132 = vmatprep.subr.mxu0 0.0
    %133 = vmatpush1.msra.mxu0 0.0
    %134 = vmatprep.subr.mxu0 0.0
    %135 = vmatpush1.msra.mxu0 0.0
    %136 = vmatprep.subr.mxu0 0.0
    %137 = vmatpush1.msra.mxu0 0.0
    %138 = vmatprep.subr.mxu0 0.0
    %139 = vmatpush1.msra.mxu0 0.0
    %140 = vmatprep.subr.mxu0 0.0
    %141 = vmatpush1.msra.mxu0 0.0
    %142 = vmatprep.subr.mxu0 0.0
    %143 = vmatpush1.msra.mxu0 0.0
    %144 = vmatprep.subr.mxu0 0.0
    %145 = vmatpush1.msra.mxu0 0.0
    %146 = vmatprep.subr.mxu0 0.0
    %147 = vmatpush1.msra.mxu0 0.0
    %148 = vmatprep.subr.mxu0 0.0
    %149 = vmatpush1.msra.mxu0 0.0
    %150 = vmatprep.subr.mxu0 0.0
    %151 = vmatpush1.msra.mxu0 0.0
    %152 = vmatprep.subr.mxu0 0.0
    %153 = vmatpush1.msra.mxu0 0.0
    %154 = vmatprep.subr.mxu0 0.0
    %155 = vmatpush1.msra.mxu0 0.0
    %156 = vmatprep.subr.mxu0 0.0
    %157 = vmatpush1.msra.mxu0 0.0
    %158 = vmatprep.subr.mxu0 0.0
    %159 = vmatpush1.msra.mxu0 0.0
    %160 = vmatprep.subr.mxu0 0.0
    %161 = vmatpush1.msra.mxu0 0.0
    %162 = vmatprep.subr.mxu0 0.0
    %163 = vmatpush1.msra.mxu0 0.0
    %164 = vmatprep.subr.mxu0 0.0
    %165 = vmatpush1.msra.mxu0 0.0
    %166 = vmatprep.subr.mxu0 0.0
    %167 = vmatpush1.msra.mxu0 0.0
    %168 = vmatprep.subr.mxu0 0.0
    %169 = vmatpush1.msra.mxu0 0.0
    %170 = vmatprep.subr.mxu0 0.0
    %171 = vmatpush1.msra.mxu0 0.0
    %172 = vmatprep.subr.mxu0 0.0
    %173 = vmatpush1.msra.mxu0 0.0
    %174 = vmatprep.subr.mxu0 0.0
    %175 = vmatpush1.msra.mxu0 0.0
    %176 = vmatprep.subr.mxu0 0.0
    %177 = vmatpush1.msra.mxu0 0.0
    %178 = vmatprep.subr.mxu0 0.0
    %179 = vmatpush1.msra.mxu0 0.0
    %180 = vmatprep.subr.mxu0 0.0
    %181 = vmatpush1.msra.mxu0 0.0
    %182 = vmatprep.mubr.f32.mxu0 0.0
    %183 = vmatmul.mubr.f32.gmra.mrb[0].mxu0 %v109
    %v184 = vpop.f32.mrb[0].mxu0
    %v185 = vadd.f32 %v105, %v184
    %v186 = vpop.f32.mrb[0].mxu0
    %187 = vmatprep.mubr.f32.mxu0 0.0
    %188 = vmatmul.mubr.f32.gmra.mrb[0].mxu0 %v112
    %v189 = vpop.f32.mrb[0].mxu0
    %v190 = vadd.f32 %v105, %v189
    %v191 = vpop.f32.mrb[0].mxu0
    %192 = vdwg.mxu0
    %v193 = vmul.f32 %v185, 0.01
    %v194 = vmul.f32 %v190, 0.01
    %v195 = vmax.f32 %v185, %v193
    %v196 = vmax.f32 %v190, %v194
    %v197 = vld [vmem:[%s3] sm:$0xff]
    %v198 = vld [vmem:[%s3 + $0x8] sm:$0xff]
    %v199 = vld [vmem:[%s3 + $0x10] sm:$0xff]
    %v200 = vld [vmem:[%s3 + $0x18] sm:$0xff]
    %v201 = vld [vmem:[%s5] sm:$0x1]
    %v203 = vlaneseq
    %v204 = vshrl.u32 %v203, 7
    %v205 = vsub.s32 0, %v204
    %v206 = vrot.slane %v201, %v205
    %vm208 = vcmask 261120
    %v210 = vsel %vm208, %v195, 0
    %v213 = vsel %vm208, %v196, 0
    %215 = vmatprep.subr.mxu0 0.0
    %216 = vmatpush1.msra.mxu0 %v197
    %217 = vmatprep.subr.mxu0 0.0
    %218 = vmatpush1.msra.mxu0 %v198
    %219 = vmatprep.subr.mxu0 0.0
    %220 = vmatpush1.msra.mxu0 %v199
    %221 = vmatprep.subr.mxu0 0.0
    %222 = vmatpush1.msra.mxu0 %v200
    %223 = vmatprep.subr.mxu0 0.0
    %224 = vmatpush1.msra.mxu0 0.0
    %225 = vmatprep.subr.mxu0 0.0
    %226 = vmatpush1.msra.mxu0 0.0
    %227 = vmatprep.subr.mxu0 0.0
    %228 = vmatpush1.msra.mxu0 0.0
    %229 = vmatprep.subr.mxu0 0.0
    %230 = vmatpush1.msra.mxu0 0.0
    %231 = vmatprep.subr.mxu0 0.0
    %232 = vmatpush1.msra.mxu0 0.0
    %233 = vmatprep.subr.mxu0 0.0
    %234 = vmatpush1.msra.mxu0 0.0
    %235 = vmatprep.subr.mxu0 0.0
    %236 = vmatpush1.msra.mxu0 0.0
    %237 = vmatprep.subr.mxu0 0.0
    %238 = vmatpush1.msra.mxu0 0.0
    %239 = vmatprep.subr.mxu0 0.0
    %240 = vmatpush1.msra.mxu0 0.0
    %241 = vmatprep.subr.mxu0 0.0
    %242 = vmatpush1.msra.mxu0 0.0
    %243 = vmatprep.subr.mxu0 0.0
    %244 = vmatpush1.msra.mxu0 0.0
    %245 = vmatprep.subr.mxu0 0.0
    %246 = vmatpush1.msra.mxu0 0.0
    %247 = vmatprep.subr.mxu0 0.0
    %248 = vmatpush1.msra.mxu0 0.0
    %249 = vmatprep.subr.mxu0 0.0
    %250 = vmatpush1.msra.mxu0 0.0
    %251 = vmatprep.subr.mxu0 0.0
    %252 = vmatpush1.msra.mxu0 0.0
    %253 = vmatprep.subr.mxu0 0.0
    %254 = vmatpush1.msra.mxu0 0.0
    %255 = vmatprep.subr.mxu0 0.0
    %256 = vmatpush1.msra.mxu0 0.0
    %257 = vmatprep.subr.mxu0 0.0
    %258 = vmatpush1.msra.mxu0 0.0
    %259 = vmatprep.subr.mxu0 0.0
    %260 = vmatpush1.msra.mxu0 0.0
    %261 = vmatprep.subr.mxu0 0.0
    %262 = vmatpush1.msra.mxu0 0.0
    %263 = vmatprep.subr.mxu0 0.0
    %264 = vmatpush1.msra.mxu0 0.0
    %265 = vmatprep.subr.mxu0 0.0
    %266 = vmatpush1.msra.mxu0 0.0
    %267 = vmatprep.subr.mxu0 0.0
    %268 = vmatpush1.msra.mxu0 0.0
    %269 = vmatprep.subr.mxu0 0.0
    %270 = vmatpush1.msra.mxu0 0.0
    %271 = vmatprep.subr.mxu0 0.0
    %272 = vmatpush1.msra.mxu0 0.0
    %273 = vmatprep.subr.mxu0 0.0
    %274 = vmatpush1.msra.mxu0 0.0
    %275 = vmatprep.subr.mxu0 0.0
    %276 = vmatpush1.msra.mxu0 0.0
    %277 = vmatprep.subr.mxu0 0.0
    %278 = vmatpush1.msra.mxu0 0.0
    %279 = vmatprep.mubr.f32.mxu0 0.0
    %280 = vmatmul.mubr.f32.gmra.mrb[0].mxu0 %v210
    %v281 = vpop.f32.mrb[0].mxu0
    %v282 = vadd.f32 %v206, %v281
    %v283 = vpop.f32.mrb[0].mxu0
    %284 = vmatprep.mubr.f32.mxu0 0.0
    %285 = vmatmul.mubr.f32.gmra.mrb[0].mxu0 %v213
    %v286 = vpop.f32.mrb[0].mxu0
    %v287 = vadd.f32 %v206, %v286
    %v288 = vpop.f32.mrb[0].mxu0
    %289 = vdwg.mxu0
    %v290 = vmul.f32 %v282, 0.01
    %v291 = vmul.f32 %v287, 0.01
    %v292 = vmax.f32 %v282, %v290
    %v293 = vmax.f32 %v287, %v291
    %294 = vst [vmem:[#allocation5] sm:$0xff] %v292
    %295 = vst [vmem:[#allocation5 + $0x8] sm:$0xff] %v293
    // Predicated region
    $region30: #{tpu_custom_call.1} parent=1 // pred_check
      _
    $region31: #{tpu_custom_call.1} parent=1 // pred_check_branch
      %297 = sbr.rel (0) target = $region33
    $region32: #{tpu_custom_call.1} parent=1 // pred_region
      %s299 = ssub.s32 256, 256
      %300 = vsyncadd [#allocation4], %s299
      %s301 = sshll.u32 [#allocation5], 4
      %s302 = int_to_ptr.vmem [resolvable:$true] %s301
      %307 = dma.vmem_to_hbm [thread:$0]  %s302, 256, %s6, [#allocation4], 128, 128, 8
    $region33: #{tpu_custom_call.1} parent=1 // pred_fallthru
      _
    // Predicated region
    $region34: #{tpu_custom_call.1} parent=1 // pred_check
      _
    $region35: #{tpu_custom_call.1} parent=1 // pred_check_branch
      %309 = sbr.rel (0) target = $region37
    $region36: #{tpu_custom_call.1} parent=1 // pred_region
      %310 = dma.done [#allocation4], 256
    $region37: #{tpu_custom_call.1} parent=1 // pred_fallthru
      _
    %311 = vsyncpa [#allocation3], 1
    %312 = vsyncpa [#allocation4], 1

</llo_original>
